<compile_context>
chip_gen: v5e
topology: v5e:2x2
jax: 0.10.0
libtpu: 0.0.40
codegen_flags: <defaults>
</compile_context>

<pallas_src>
import functools

import jax
import jax.numpy as jnp
from jax import lax
from jax.experimental import pallas as pl
from jax.experimental.pallas import tpu as pltpu

_LANE = 128
_SUB = 8


def _cdiv(a, b):
    return -(-a // b)


def _default_parallel_chunks():
    # v7x has two TensorCores per chip; split the spatial sweep across them.
    # On single-TC chips (v5e/v6e) a second chunk only adds overhead.
    try:
        kind = jax.devices()[0].device_kind.lower()
        if "v7" in kind or "7x" in kind:
            return 2
    except Exception:
        pass
    return 1


def _dice_kernel(p_ref, t_ref, out_ref, acc_a, acc_b, acc_g, acc_f,
                 *, hw, tr, n_inner, has_ragged):
    """Grid: (P parallel spatial chunks, row tiles within a chunk).

    p_ref: (N, 2, TR, 128) logits; t_ref: (N, TR, 128) integer labels in {0,1}.
    Accumulators are (N, 128) partial sums (reduced over rows per tile).
    """
    k = pl.program_id(1)
    nk = pl.num_programs(1)

    @pl.when(k == 0)
    def _():
        acc_a[...] = jnp.zeros_like(acc_a)
        acc_b[...] = jnp.zeros_like(acc_b)
        acc_g[...] = jnp.zeros_like(acc_g)
        acc_f[...] = jnp.zeros_like(acc_f)

    x0 = p_ref[:, 0, :, :].astype(jnp.float32)       # (N, TR, 128) class-0 logits
    x1 = p_ref[:, 1, :, :].astype(jnp.float32)       # (N, TR, 128) class-1 logits
    t1 = t_ref[...].astype(jnp.float32)              # (N, TR, 128) labels in {0,1}

    # 2-class softmax == sigmoid(x1 - x0); the tanh form keeps the
    # transcendental on the EUP and avoids a full-precision VALU divide.
    pr1 = 0.5 * jnp.tanh(0.5 * (x1 - x0)) + 0.5

    def accumulate(pr, tg):
        # Reduce over the row (sublane) axis per tile -> tiny accumulators.
        acc_a[...] += jnp.sum(pr * tg, axis=1)        # sum(pr1 * t1)
        acc_b[...] += jnp.sum(pr * pr, axis=1)        # sum(pr1^2)
        acc_g[...] += jnp.sum(pr, axis=1)             # sum(pr1)
        acc_f[...] += jnp.sum(tg, axis=1)             # sum(t1)

    if has_ragged:  # trace-time flag: only emitted when padded/OOB elements exist
        start = (pl.program_id(0) * n_inner + k) * (tr * _LANE)
        is_clean = start + tr * _LANE <= hw

        @pl.when(is_clean)
        def _():
            accumulate(pr1, t1)                       # interior tiles: no mask cost

        @pl.when(jnp.logical_not(is_clean))
        def _():
            # jnp.where (not multiply) so OOB garbage/NaN logits cannot leak in.
            row = lax.broadcasted_iota(jnp.int32, pr1.shape, 1)
            lane = lax.broadcasted_iota(jnp.int32, pr1.shape, 2)
            valid = (start + row * _LANE + lane) < hw
            accumulate(jnp.where(valid, pr1, 0.0), jnp.where(valid, t1, 0.0))
    else:
        accumulate(pr1, t1)

    @pl.when(k == nk - 1)
    def _():
        a = jnp.sum(acc_a[...], axis=1)
        b = jnp.sum(acc_b[...], axis=1)
        g = jnp.sum(acc_g[...], axis=1)
        f = jnp.sum(acc_f[...], axis=1)
        z = jnp.zeros_like(a)
        out_ref[...] = jnp.stack([a, b, g, f, z, z, z, z], axis=1)[None]


def dice_loss_pallas(predict, target, smooth=1e-6, *,
                     parallel_chunks=None, max_rows_per_tile=None):
    """predict: [N, 2, H, W] logits; target: [N, 1, H, W] integer labels (0/1)."""
    N, C, H, W = predict.shape
    assert C == 2, "this kernel implements the 2-class DiceLoss"
    HW = H * W

    p = predict.reshape(N, C, HW)
    t = target.reshape(N, HW)

    # Lane alignment: pad only when HW is not a multiple of 128 (the padded
    # columns are masked away inside the kernel's ragged-tile branch).
    HW128 = _cdiv(HW, _LANE) * _LANE
    if HW128 != HW:
        p = jnp.pad(p, ((0, 0), (0, 0), (0, HW128 - HW)))
        t = jnp.pad(t, ((0, 0), (0, HW128 - HW)))
    R = HW128 // _LANE

    # Dense-sublane layout: spatial axis -> (rows, 128); contiguous reshape.
    p = p.reshape(N, C, R, _LANE)
    t = t.reshape(N, R, _LANE)

    # --- row-tile size: largest multiple of 8 within a VMEM budget ---
    psz = p.dtype.itemsize
    tsz = t.dtype.itemsize
    bytes_per_row = N * _LANE * 2 * (C * psz + tsz)      # double-buffered blocks
    budget = 8 * 1024 * 1024                             # f32 temporaries take ~1x more
    tr_cap = max(_SUB, min(2048, (budget // bytes_per_row) // _SUB * _SUB))
    if max_rows_per_tile is not None:
        tr_cap = min(tr_cap, max(_SUB, (max_rows_per_tile // _SUB) * _SUB))
    TR = R if R <= tr_cap else tr_cap

    n_valid = _cdiv(R, TR)                               # row tiles with real data

    P = parallel_chunks if parallel_chunks is not None else _default_parallel_chunks()
    P = max(1, min(int(P), n_valid))
    n_inner = _cdiv(n_valid, P)
    total_tiles = P * n_inner
    has_ragged = total_tiles * TR * _LANE != HW
    clamp = total_tiles > n_valid          # chunk-overrun tiles (fully masked)

    def p_idx(pi, k):
        g = pi * n_inner + k
        if clamp:
            g = jnp.minimum(g, n_valid - 1)
        return (0, 0, g, 0)

    def t_idx(pi, k):
        g = pi * n_inner + k
        if clamp:
            g = jnp.minimum(g, n_valid - 1)
        return (0, g, 0)

    kernel = functools.partial(_dice_kernel, hw=HW, tr=TR, n_inner=n_inner,
                               has_ragged=has_ragged)

    sums = pl.pallas_call(
        kernel,
        out_shape=jax.ShapeDtypeStruct((P, N, 8), jnp.float32),
        grid_spec=pltpu.PrefetchScalarGridSpec(
            num_scalar_prefetch=0,
            grid=(P, n_inner),
            in_specs=[
                pl.BlockSpec((N, C, TR, _LANE), p_idx),
                pl.BlockSpec((N, TR, _LANE), t_idx),
            ],
            out_specs=pl.BlockSpec((1, N, 8), lambda pi, k: (pi, 0, 0)),
            scratch_shapes=[pltpu.VMEM((N, _LANE), jnp.float32)] * 4,
        ),
        compiler_params=pltpu.CompilerParams(
            dimension_semantics=("parallel", "arbitrary"),
            vmem_limit_bytes=32 * 1024 * 1024),
    )(p, t)

    # --- tiny O(N) epilogue in plain JAX ---
    A = jnp.sum(sums[:, :, 0], axis=0)     # sum(pr1 * t1)   per sample
    B = jnp.sum(sums[:, :, 1], axis=0)     # sum(pr1^2)      per sample
    G = jnp.sum(sums[:, :, 2], axis=0)     # sum(pr1)        per sample
    F = jnp.sum(sums[:, :, 3], axis=0)     # sum(t1)         per sample

    hwf = jnp.float32(HW)
    # class 1 (t1^2 == t1 for labels in {0,1})
    num1 = A + smooth
    den1 = B + F + smooth
    loss1 = jnp.mean(1.0 - num1 / den1)
    # class 0, derived from pr0 = 1 - pr1, t0 = 1 - t1
    num0 = (hwf - G - F + A) + smooth
    den0 = (2.0 * hwf - 2.0 * G + B - F) + smooth
    loss0 = jnp.mean(1.0 - num0 / den0)

    # frequency weights (inf/nan when there is no foreground, like the reference)
    foreground = jnp.sum(F)
    background = jnp.float32(N * HW) - foreground
    w1 = 1.0 / foreground
    w0 = 1.0 / background
    f0 = w0 / (w0 + w1)
    f1 = w1 / (w0 + w1)

    total_loss = loss0 * f0 + loss1 * f1
    return total_loss / C


def dice_loss_ref(predict, target, smooth=1e-6):
    """Pure-JAX reference reproducing the PyTorch DiceLoss forward."""
    N, C, H, W = predict.shape
    t = target.reshape(N, 1, H, W)
    onehot = (jnp.arange(C).reshape(1, C, 1, 1) == t).astype(jnp.float32)
    tf = t.astype(jnp.float32)
    foreground = tf.sum()
    background = tf.size - foreground
    w1, w0 = 1.0 / foreground, 1.0 / background
    weight = jnp.array([w0 / (w0 + w1), w1 / (w0 + w1)])
    sm = jax.nn.softmax(predict, axis=1)
    total = 0.0
    for i in range(C):
        pr = sm[:, i].reshape(N, -1)
        tg = onehot[:, i].reshape(N, -1)
        num = jnp.sum(pr * tg, axis=1) + smooth
        den = jnp.sum(pr ** 2 + tg ** 2, axis=1) + smooth
        total = total + jnp.mean(1.0 - num / den) * weight[i]
    return total / C


if __name__ == "__main__":
    key = jax.random.PRNGKey(0)
    N, C = 2, 2

    # (H, W, max_rows_per_tile, parallel_chunks):
    #   aligned single tile / lane-padded masked tile / aligned big tile /
    #   multi-tile grid with 2 chunks / ragged rows + lane pad + chunk overrun.
    cases = [
        (16, 16, None, None),
        (15, 15, None, None),
        (128, 128, None, None),
        (128, 128, 8, 2),
        (72, 40, 8, 2),
    ]
    for (H, W, max_rows, chunks) in cases:
        k1, k2, key = jax.random.split(key, 3)
        predict = jax.random.normal(k1, (N, C, H, W), dtype=jnp.float32)
        target = jax.random.bernoulli(k2, p=0.3, shape=(N, 1, H, W)).astype(jnp.int32)

        out = dice_loss_pallas(predict, target,
                               parallel_chunks=chunks, max_rows_per_tile=max_rows)
        out = jax.block_until_ready(out)

        ref = dice_loss_ref(predict, target)
        assert jnp.allclose(out, ref, atol=1e-5, rtol=1e-4), (H, W, out, ref)

    print("KERNEL_OK")
</pallas_src>

<mosaic_0001>
module attributes {stable_mosaic.version = 11 : i64} {
  func.func @_dice_kernel(%arg0: i32, %arg1: i32, %arg2: memref<2x2x2x128xf32, #tpu.memory_space<vmem>>, %arg3: memref<2x2x128xi32, #tpu.memory_space<vmem>>, %arg4: memref<1x2x8xf32, #tpu.memory_space<vmem>>, %arg5: memref<2x128xf32, #tpu.memory_space<vmem>>, %arg6: memref<2x128xf32, #tpu.memory_space<vmem>>, %arg7: memref<2x128xf32, #tpu.memory_space<vmem>>, %arg8: memref<2x128xf32, #tpu.memory_space<vmem>>) attributes {dimension_semantics = [#tpu.dimension_semantics<parallel>, #tpu.dimension_semantics<arbitrary>], iteration_bounds = array<i64: 1, 1>, scalar_prefetch = 0 : i64, scratch_operands = 4 : i64, tpu.core_type = #tpu.core_type<tc>, window_params = [{transform_indices = @transform_0, window_bounds = array<i64: 2, 2, 2, 128>}, {transform_indices = @transform_1, window_bounds = array<i64: 2, 2, 128>}, {transform_indices = @transform_2, window_bounds = array<i64: 1, 2, 8>}]} {
    %c0_i32 = arith.constant 0 : i32
    %0 = arith.cmpi eq, %arg1, %c0_i32 : i32
    %1 = arith.extui %0 : i1 to i32
    %c0_i32_0 = arith.constant 0 : i32
    %2 = arith.cmpi ne, %1, %c0_i32_0 : i32
    scf.if %2 {
      %cst_34 = arith.constant 0.000000e+00 : f32
      %38 = vector.broadcast %cst_34 : f32 to vector<2x128xf32>
      %c0_35 = arith.constant 0 : index
      %c0_36 = arith.constant 0 : index
      %39 = vector.load %arg5[%c0_35, %c0_36] : memref<2x128xf32, #tpu.memory_space<vmem>>, vector<2x128xf32>
      tpu.vector_store %arg5[%c0_35, %c0_36], %38 {strides = array<i32>} : memref<2x128xf32, #tpu.memory_space<vmem>>, vector<2x128xf32>,
      %cst_37 = arith.constant 0.000000e+00 : f32
      %40 = vector.broadcast %cst_37 : f32 to vector<2x128xf32>
      %c0_38 = arith.constant 0 : index
      %c0_39 = arith.constant 0 : index
      %41 = vector.load %arg6[%c0_38, %c0_39] : memref<2x128xf32, #tpu.memory_space<vmem>>, vector<2x128xf32>
      tpu.vector_store %arg6[%c0_38, %c0_39], %40 {strides = array<i32>} : memref<2x128xf32, #tpu.memory_space<vmem>>, vector<2x128xf32>,
      %cst_40 = arith.constant 0.000000e+00 : f32
      %42 = vector.broadcast %cst_40 : f32 to vector<2x128xf32>
      %c0_41 = arith.constant 0 : index
      %c0_42 = arith.constant 0 : index
      %43 = vector.load %arg7[%c0_41, %c0_42] : memref<2x128xf32, #tpu.memory_space<vmem>>, vector<2x128xf32>
      tpu.vector_store %arg7[%c0_41, %c0_42], %42 {strides = array<i32>} : memref<2x128xf32, #tpu.memory_space<vmem>>, vector<2x128xf32>,
      %cst_43 = arith.constant 0.000000e+00 : f32
      %44 = vector.broadcast %cst_43 : f32 to vector<2x128xf32>
      %c0_44 = arith.constant 0 : index
      %c0_45 = arith.constant 0 : index
      %45 = vector.load %arg8[%c0_44, %c0_45] : memref<2x128xf32, #tpu.memory_space<vmem>>, vector<2x128xf32>
      tpu.vector_store %arg8[%c0_44, %c0_45], %44 {strides = array<i32>} : memref<2x128xf32, #tpu.memory_space<vmem>>, vector<2x128xf32>,
    } else {
    }
    %c0 = arith.constant 0 : index
    %c0_1 = arith.constant 0 : index
    %c0_2 = arith.constant 0 : index
    %c0_3 = arith.constant 0 : index
    %3 = vector.load %arg2[%c0, %c0_1, %c0_2, %c0_3] : memref<2x2x2x128xf32, #tpu.memory_space<vmem>>, vector<2x1x2x128xf32>
    %4 = vector.shape_cast %3 : vector<2x1x2x128xf32> to vector<2x2x128xf32>
    %c0_4 = arith.constant 0 : index
    %c1 = arith.constant 1 : index
    %c0_5 = arith.constant 0 : index
    %c0_6 = arith.constant 0 : index
    %5 = vector.load %arg2[%c0_4, %c1, %c0_5, %c0_6] : memref<2x2x2x128xf32, #tpu.memory_space<vmem>>, vector<2x1x2x128xf32>
    %6 = vector.shape_cast %5 : vector<2x1x2x128xf32> to vector<2x2x128xf32>
    %c0_7 = arith.constant 0 : index
    %c0_8 = arith.constant 0 : index
    %c0_9 = arith.constant 0 : index
    %7 = vector.load %arg3[%c0_7, %c0_8, %c0_9] : memref<2x2x128xi32, #tpu.memory_space<vmem>>, vector<2x2x128xi32>
    %8 = arith.sitofp %7 : vector<2x2x128xi32> to vector<2x2x128xf32>
    %9 = arith.subf %6, %4 : vector<2x2x128xf32>
    %cst = arith.constant 5.000000e-01 : f32
    %10 = vector.broadcast %cst : f32 to vector<2x2x128xf32>
    %11 = arith.mulf %10, %9 : vector<2x2x128xf32>
    %12 = math.tanh %11 : vector<2x2x128xf32>
    %cst_10 = arith.constant 5.000000e-01 : f32
    %13 = vector.broadcast %cst_10 : f32 to vector<2x2x128xf32>
    %14 = arith.mulf %13, %12 : vector<2x2x128xf32>
    %cst_11 = arith.constant 5.000000e-01 : f32
    %15 = vector.broadcast %cst_11 : f32 to vector<2x2x128xf32>
    %16 = arith.addf %14, %15 : vector<2x2x128xf32>
    %c0_12 = arith.constant 0 : index
    %c0_13 = arith.constant 0 : index
    %17 = vector.load %arg5[%c0_12, %c0_13] : memref<2x128xf32, #tpu.memory_space<vmem>>, vector<2x128xf32>
    %18 = arith.mulf %16, %8 : vector<2x2x128xf32>
    %cst_14 = arith.constant dense<0.000000e+00> : vector<2x128xf32>
    %19 = vector.multi_reduction <add>, %18, %cst_14 [1] : vector<2x2x128xf32> to vector<2x128xf32>
    %20 = arith.addf %17, %19 : vector<2x128xf32>
    %c0_15 = arith.constant 0 : index
    %c0_16 = arith.constant 0 : index
    %21 = vector.load %arg5[%c0_15, %c0_16] : memref<2x128xf32, #tpu.memory_space<vmem>>, vector<2x128xf32>
    tpu.vector_store %arg5[%c0_15, %c0_16], %20 {strides = array<i32>} : memref<2x128xf32, #tpu.memory_space<vmem>>, vector<2x128xf32>,
    %c0_17 = arith.constant 0 : index
    %c0_18 = arith.constant 0 : index
    %22 = vector.load %arg6[%c0_17, %c0_18] : memref<2x128xf32, #tpu.memory_space<vmem>>, vector<2x128xf32>
    %23 = arith.mulf %16, %16 : vector<2x2x128xf32>
    %cst_19 = arith.constant dense<0.000000e+00> : vector<2x128xf32>
    %24 = vector.multi_reduction <add>, %23, %cst_19 [1] : vector<2x2x128xf32> to vector<2x128xf32>
    %25 = arith.addf %22, %24 : vector<2x128xf32>
    %c0_20 = arith.constant 0 : index
    %c0_21 = arith.constant 0 : index
    %26 = vector.load %arg6[%c0_20, %c0_21] : memref<2x128xf32, #tpu.memory_space<vmem>>, vector<2x128xf32>
    tpu.vector_store %arg6[%c0_20, %c0_21], %25 {strides = array<i32>} : memref<2x128xf32, #tpu.memory_space<vmem>>, vector<2x128xf32>,
    %c0_22 = arith.constant 0 : index
    %c0_23 = arith.constant 0 : index
    %27 = vector.load %arg7[%c0_22, %c0_23] : memref<2x128xf32, #tpu.memory_space<vmem>>, vector<2x128xf32>
    %cst_24 = arith.constant dense<0.000000e+00> : vector<2x128xf32>
    %28 = vector.multi_reduction <add>, %16, %cst_24 [1] : vector<2x2x128xf32> to vector<2x128xf32>
    %29 = arith.addf %27, %28 : vector<2x128xf32>
    %c0_25 = arith.constant 0 : index
    %c0_26 = arith.constant 0 : index
    %30 = vector.load %arg7[%c0_25, %c0_26] : memref<2x128xf32, #tpu.memory_space<vmem>>, vector<2x128xf32>
    tpu.vector_store %arg7[%c0_25, %c0_26], %29 {strides = array<i32>} : memref<2x128xf32, #tpu.memory_space<vmem>>, vector<2x128xf32>,
    %c0_27 = arith.constant 0 : index
    %c0_28 = arith.constant 0 : index
    %31 = vector.load %arg8[%c0_27, %c0_28] : memref<2x128xf32, #tpu.memory_space<vmem>>, vector<2x128xf32>
    %cst_29 = arith.constant dense<0.000000e+00> : vector<2x128xf32>
    %32 = vector.multi_reduction <add>, %8, %cst_29 [1] : vector<2x2x128xf32> to vector<2x128xf32>
    %33 = arith.addf %31, %32 : vector<2x128xf32>
    %c0_30 = arith.constant 0 : index
    %c0_31 = arith.constant 0 : index
    %34 = vector.load %arg8[%c0_30, %c0_31] : memref<2x128xf32, #tpu.memory_space<vmem>>, vector<2x128xf32>
    tpu.vector_store %arg8[%c0_30, %c0_31], %33 {strides = array<i32>} : memref<2x128xf32, #tpu.memory_space<vmem>>, vector<2x128xf32>,
    %c0_i32_32 = arith.constant 0 : i32
    %35 = arith.cmpi eq, %arg1, %c0_i32_32 : i32
    %36 = arith.extui %35 : i1 to i32
    %c0_i32_33 = arith.constant 0 : i32
    %37 = arith.cmpi ne, %36, %c0_i32_33 : i32
    scf.if %37 {
      %c0_34 = arith.constant 0 : index
      %c0_35 = arith.constant 0 : index
      %38 = vector.load %arg5[%c0_34, %c0_35] : memref<2x128xf32, #tpu.memory_space<vmem>>, vector<2x128xf32>
      %cst_36 = arith.constant dense<0.000000e+00> : vector<2xf32>
      %39 = vector.multi_reduction <add>, %38, %cst_36 [1] : vector<2x128xf32> to vector<2xf32>
      %c0_37 = arith.constant 0 : index
      %c0_38 = arith.constant 0 : index
      %40 = vector.load %arg6[%c0_37, %c0_38] : memref<2x128xf32, #tpu.memory_space<vmem>>, vector<2x128xf32>
      %cst_39 = arith.constant dense<0.000000e+00> : vector<2xf32>
      %41 = vector.multi_reduction <add>, %40, %cst_39 [1] : vector<2x128xf32> to vector<2xf32>
      %c0_40 = arith.constant 0 : index
      %c0_41 = arith.constant 0 : index
      %42 = vector.load %arg7[%c0_40, %c0_41] : memref<2x128xf32, #tpu.memory_space<vmem>>, vector<2x128xf32>
      %cst_42 = arith.constant dense<0.000000e+00> : vector<2xf32>
      %43 = vector.multi_reduction <add>, %42, %cst_42 [1] : vector<2x128xf32> to vector<2xf32>
      %c0_43 = arith.constant 0 : index
      %c0_44 = arith.constant 0 : index
      %44 = vector.load %arg8[%c0_43, %c0_44] : memref<2x128xf32, #tpu.memory_space<vmem>>, vector<2x128xf32>
      %cst_45 = arith.constant dense<0.000000e+00> : vector<2xf32>
      %45 = vector.multi_reduction <add>, %44, %cst_45 [1] : vector<2x128xf32> to vector<2xf32>
      %cst_46 = arith.constant 0.000000e+00 : f32
      %46 = vector.broadcast %cst_46 : f32 to vector<2xf32>
      %47 = vector.shape_cast %39 : vector<2xf32> to vector<2x1xf32>
      %48 = vector.shape_cast %41 : vector<2xf32> to vector<2x1xf32>
      %49 = vector.shape_cast %43 : vector<2xf32> to vector<2x1xf32>
      %50 = vector.shape_cast %45 : vector<2xf32> to vector<2x1xf32>
      %51 = vector.shape_cast %46 : vector<2xf32> to vector<2x1xf32>
      %52 = vector.shape_cast %46 : vector<2xf32> to vector<2x1xf32>
      %53 = vector.shape_cast %46 : vector<2xf32> to vector<2x1xf32>
      %54 = vector.shape_cast %46 : vector<2xf32> to vector<2x1xf32>
      %55 = tpu.concatenate %47, %48, %49, %50, %51, %52, %53, %54 in 1 : vector<2x1xf32>, vector<2x1xf32>, vector<2x1xf32>, vector<2x1xf32>, vector<2x1xf32>, vector<2x1xf32>, vector<2x1xf32>, vector<2x1xf32> -> vector<2x8xf32>
      %56 = vector.shape_cast %55 : vector<2x8xf32> to vector<1x2x8xf32>
      %c0_47 = arith.constant 0 : index
      %c0_48 = arith.constant 0 : index
      %c0_49 = arith.constant 0 : index
      %57 = vector.load %arg4[%c0_47, %c0_48, %c0_49] : memref<1x2x8xf32, #tpu.memory_space<vmem>>, vector<1x2x8xf32>
      tpu.vector_store %arg4[%c0_47, %c0_48, %c0_49], %56 {strides = array<i32>} : memref<1x2x8xf32, #tpu.memory_space<vmem>>, vector<1x2x8xf32>,
    } else {
    }
    return
  }
  func.func @transform_0(%arg0: i32, %arg1: i32) -> (i32, i32, i32, i32) {
    %c1_i32 = arith.constant 1 : i32
    %0 = arith.muli %arg0, %c1_i32 : i32
    %1 = arith.addi %0, %arg1 : i32
    %c0_i32 = arith.constant 0 : i32
    %c0_i32_0 = arith.constant 0 : i32
    %c0_i32_1 = arith.constant 0 : i32
    %c0_i32_2 = arith.constant 0 : i32
    return %c0_i32, %c0_i32_0, %1, %c0_i32_1 : i32, i32, i32, i32
  }
  func.func @transform_1(%arg0: i32, %arg1: i32) -> (i32, i32, i32) {
    %c1_i32 = arith.constant 1 : i32
    %0 = arith.muli %arg0, %c1_i32 : i32
    %1 = arith.addi %0, %arg1 : i32
    %c0_i32 = arith.constant 0 : i32
    %c0_i32_0 = arith.constant 0 : i32
    %c0_i32_1 = arith.constant 0 : i32
    return %c0_i32, %1, %c0_i32_0 : i32, i32, i32
  }
  func.func @transform_2(%arg0: i32, %arg1: i32) -> (i32, i32, i32) {
    %c0_i32 = arith.constant 0 : i32
    %c0_i32_0 = arith.constant 0 : i32
    %c0_i32_1 = arith.constant 0 : i32
    return %arg0, %c0_i32, %c0_i32_0 : i32, i32, i32
  }
}

</mosaic_0001>

<llo_original>
// kernel: tpu_custom_call.1
$region0: #{tpu_custom_call.1}
  #allocation0 [shape = 'u32[]', space=smem, size = 0x4, offset = 0x4, fixed_abs, tag = 'smem constant byte address 0x4 - core index']
  #allocation1 [shape = 'u32[72,128]{1,0:T(1,128)}', space=vmem, size = 0x9000, scoped, tag = 'internal scratch']
  #allocation2 [shape = 'f32[2,128]{1,0:T(2,128)}', space=vmem, size = 0x400, scoped, tag = 'scratch operand']
  #allocation3 [shape = 'f32[2,128]{1,0:T(2,128)}', space=vmem, size = 0x400, scoped, tag = 'scratch operand']
  #allocation4 [shape = 'f32[2,128]{1,0:T(2,128)}', space=vmem, size = 0x400, scoped, tag = 'scratch operand']
  #allocation5 [shape = 'f32[2,128]{1,0:T(2,128)}', space=vmem, size = 0x400, scoped, tag = 'scratch operand']
  %s0 = inlined_call_operand.hbm [shape: f32[2,2,2,128], index: 0, kind: input, shape index: {}]
  %s1 = inlined_call_operand.hbm [shape: s32[2,2,128], index: 1, kind: input, shape index: {}]
  %s2 = inlined_call_operand.hbm [shape: f32[1,2,8], index: 2, kind: output, shape index: {}]
  %s3 = sld [smem:[#allocation0]]
  $region34: #{tpu_custom_call.1} parent=0
    _
  %s5 = ssub.s32 1, %s3
  %s6 = scalar_select 0, %s5, %s3
  $region1: #{tpu_custom_call.1} parent=0
    #allocation6 [shape = 'u8[4096]{0}', space=vmem, size = 0x1000, scoped, tag = 'input window, operand 0, single buffered']
    #allocation7 [shape = 's32[1]{0}', space=sflag, size = 0x4, scoped, tag = 'scoped memory for tpu_custom_call.1']
    #allocation8 [shape = 's32[1]{0}', space=sflag, size = 0x4, scoped, tag = 'scoped memory for tpu_custom_call.1']
    #allocation9 [shape = 'u8[2048]{0}', space=vmem, size = 0x800, scoped, tag = 'input window, operand 1, single buffered']
    #allocation10 [shape = 's32[1]{0}', space=sflag, size = 0x4, scoped, tag = 'scoped memory for tpu_custom_call.1']
    #allocation11 [shape = 'u8[1024]{0}', space=vmem, size = 0x400, scoped, tag = 'output window, operand 0, single buffered']
    %7 = vsyncpa [#allocation7], 0
    %8 = vsyncpa [#allocation10], 0
    %9 = vsyncpa [#allocation8], 0
    // Predicated region
    $region2: #{tpu_custom_call.1} parent=1 // pred_check
      _
    $region3: #{tpu_custom_call.1} parent=1 // pred_check_branch
      %11 = sbr.rel (0) target = $region5
    $region4: #{tpu_custom_call.1} parent=1 // pred_region
      %s12 = sadd.s32 0, 0
      %14 = vsyncadd [#allocation7], 0
      %s15 = smul.addr %s12, 2
      %s16 = scalar_lea.hbm %s0, %s15
      %s17 = sshll.u32 %s16, 4
      %s18 = int_to_ptr.hbm [resolvable:$true] %s17
      %s19 = sshll.u32 [#allocation6], 4
      %s20 = int_to_ptr.vmem [resolvable:$true] %s19
      %25 = dma.hbm_to_vmem [thread:$0]  %s18, 128, %s20, [#allocation7], 32, 32, 2
    $region5: #{tpu_custom_call.1} parent=1 // pred_fallthru
      _
    // Predicated region
    $region6: #{tpu_custom_call.1} parent=1 // pred_check
      _
    $region7: #{tpu_custom_call.1} parent=1 // pred_check_branch
      %27 = sbr.rel (0) target = $region9
    $region8: #{tpu_custom_call.1} parent=1 // pred_region
      %s28 = sadd.s32 0, 0
      %30 = vsyncadd [#allocation10], 0
      %s31 = smul.addr %s28, 2
      %s32 = scalar_lea.hbm %s1, %s31
      %s33 = sshll.u32 %s32, 4
      %s34 = int_to_ptr.hbm [resolvable:$true] %s33
      %s35 = sshll.u32 [#allocation9], 4
      %s36 = int_to_ptr.vmem [resolvable:$true] %s35
      %41 = dma.hbm_to_vmem [thread:$0]  %s34, 64, %s36, [#allocation10], 32, 32, 2
    $region9: #{tpu_custom_call.1} parent=1 // pred_fallthru
      _
    // Predicated region
    $region10: #{tpu_custom_call.1} parent=1 // pred_check
      _
    $region11: #{tpu_custom_call.1} parent=1 // pred_check_branch
      %43 = sbr.rel (0) target = $region13
    $region12: #{tpu_custom_call.1} parent=1 // pred_region
      %45 = dma.done [#allocation7], 128
    $region13: #{tpu_custom_call.1} parent=1 // pred_fallthru
      _
    // Predicated region
    $region14: #{tpu_custom_call.1} parent=1 // pred_check
      _
    $region15: #{tpu_custom_call.1} parent=1 // pred_check_branch
      %47 = sbr.rel (0) target = $region17
    $region16: #{tpu_custom_call.1} parent=1 // pred_region
      %49 = dma.done [#allocation10], 64
    $region17: #{tpu_custom_call.1} parent=1 // pred_fallthru
      _
    %s50 = sadd.s32 0, 0
    %s51 = sadd.s32 0, 0
    %p52 = scmp.eq.s32.totalorder 0, 0
    // Predicated region
    $region18: #{tpu_custom_call.1} parent=1 // pred_check
      %p53 = pneg %p52
    $region19: #{tpu_custom_call.1} parent=1 // pred_check_branch
      %55 = sbr.rel (%p53) target = $region21
    $region20: #{tpu_custom_call.1} parent=1 // pred_region
      %56 = vst [vmem:[#allocation2] sm:$0x3] 0.0
      %57 = vst [vmem:[#allocation3] sm:$0x3] 0.0
      %58 = vst [vmem:[#allocation4] sm:$0x3] 0.0
      %59 = vst [vmem:[#allocation5] sm:$0x3] 0.0
    $region21: #{tpu_custom_call.1} parent=1 // pred_fallthru
      _
    %v60 = vld [vmem:[#allocation6] sm:$0x3]
    %v61 = vld [vmem:[#allocation6 + $0x4] sm:$0x3]
    %s62 = scalar_lea.vmem [#allocation6], 2
    %v63 = vld [vmem:[%s62] sm:$0x3]
    %v64 = vld [vmem:[%s62 + $0x4] sm:$0x3]
    %v65 = vld [vmem:[#allocation9] sm:$0x3]
    %v66 = vld [vmem:[#allocation9 + $0x2] sm:$0x3]
    %v67 = vcvt.s32.f32 %v65
    %v68 = vcvt.s32.f32 %v66
    %v69 = vsub.f32 %v63, %v60
    %v70 = vsub.f32 %v64, %v61
    %v71 = vmul.f32 %v69, 0.5
    %v72 = vmul.f32 %v70, 0.5
    %v73 = vtanh.pop %v71
    %v74 = vtanh.pop %v72
    %v75 = vmul.f32 %v73, 0.5
    %v76 = vmul.f32 %v74, 0.5
    %v77 = vadd.f32 %v75, 0.5
    %v78 = vadd.f32 %v76, 0.5
    %v79 = vld [vmem:[#allocation2] sm:$0x3]
    %v80 = vmul.f32 %v77, %v67
    %v81 = vmul.f32 %v78, %v68
    %vm82 = vcmask 1041408
    %v83 = vsel %vm82, %v80, 0.0
    %v84 = vrot.slane %v83, 4
    %v85 = vadd.f32 %v83, %v84
    %v86 = vrot.slane %v85, 2
    %v87 = vadd.f32 %v85, %v86
    %v88 = vrot.slane %v87, 1
    %v89 = vadd.f32 %v87, %v88
    %v90 = vsel %vm82, %v81, 0.0
    %v91 = vrot.slane %v90, 4
    %v92 = vadd.f32 %v90, %v91
    %v93 = vrot.slane %v92, 2
    %v94 = vadd.f32 %v92, %v93
    %v95 = vrot.slane %v94, 1
    %v96 = vadd.f32 %v94, %v95
    %vm99 = vcmask 1041409
    %v100 = vsel %vm99, %v96, %v89
    %v102 = vadd.f32 %v79, %v100
    %103 = vst [vmem:[#allocation2] sm:$0x3] %v102
    %v104 = vld [vmem:[#allocation3] sm:$0x3]
    %v105 = vmul.f32 %v77, %v77
    %v106 = vmul.f32 %v78, %v78
    %v107 = vsel %vm82, %v105, 0.0
    %v108 = vrot.slane %v107, 4
    %v109 = vadd.f32 %v107, %v108
    %v110 = vrot.slane %v109, 2
    %v111 = vadd.f32 %v109, %v110
    %v112 = vrot.slane %v111, 1
    %v113 = vadd.f32 %v111, %v112
    %v114 = vsel %vm82, %v106, 0.0
    %v115 = vrot.slane %v114, 4
    %v116 = vadd.f32 %v114, %v115
    %v117 = vrot.slane %v116, 2
    %v118 = vadd.f32 %v116, %v117
    %v119 = vrot.slane %v118, 1
    %v120 = vadd.f32 %v118, %v119
    %v123 = vsel %vm99, %v120, %v113
    %v125 = vadd.f32 %v104, %v123
    %126 = vst [vmem:[#allocation3] sm:$0x3] %v125
    %v127 = vld [vmem:[#allocation4] sm:$0x3]
    %v128 = vsel %vm82, %v77, 0.0
    %v129 = vrot.slane %v128, 4
    %v130 = vadd.f32 %v128, %v129
    %v131 = vrot.slane %v130, 2
    %v132 = vadd.f32 %v130, %v131
    %v133 = vrot.slane %v132, 1
    %v134 = vadd.f32 %v132, %v133
    %v135 = vsel %vm82, %v78, 0.0
    %v136 = vrot.slane %v135, 4
    %v137 = vadd.f32 %v135, %v136
    %v138 = vrot.slane %v137, 2
    %v139 = vadd.f32 %v137, %v138
    %v140 = vrot.slane %v139, 1
    %v141 = vadd.f32 %v139, %v140
    %v144 = vsel %vm99, %v141, %v134
    %v146 = vadd.f32 %v127, %v144
    %147 = vst [vmem:[#allocation4] sm:$0x3] %v146
    %v148 = vld [vmem:[#allocation5] sm:$0x3]
    %v149 = vsel %vm82, %v67, 0.0
    %v150 = vrot.slane %v149, 4
    %v151 = vadd.f32 %v149, %v150
    %v152 = vrot.slane %v151, 2
    %v153 = vadd.f32 %v151, %v152
    %v154 = vrot.slane %v153, 1
    %v155 = vadd.f32 %v153, %v154
    %v156 = vsel %vm82, %v68, 0.0
    %v157 = vrot.slane %v156, 4
    %v158 = vadd.f32 %v156, %v157
    %v159 = vrot.slane %v158, 2
    %v160 = vadd.f32 %v158, %v159
    %v161 = vrot.slane %v160, 1
    %v162 = vadd.f32 %v160, %v161
    %v165 = vsel %vm99, %v162, %v155
    %v167 = vadd.f32 %v148, %v165
    %168 = vst [vmem:[#allocation5] sm:$0x3] %v167
    // Predicated region
    $region22: #{tpu_custom_call.1} parent=1 // pred_check
      %p169 = pneg %p52
    $region23: #{tpu_custom_call.1} parent=1 // pred_check_branch
      %171 = sbr.rel (%p169) target = $region25
    $region24: #{tpu_custom_call.1} parent=1 // pred_region
      %v172 = vld [vmem:[#allocation2] sm:$0x3]
      %v173 = vsel %vm82, %v172, 0.0
      %174 = vadd.xlane.f32.xlu0 %v173
      %v175 = vpop.xlane.xlu0 %174
      %v176 = vld [vmem:[#allocation3] sm:$0x3]
      %v177 = vsel %vm82, %v176, 0.0
      %178 = vadd.xlane.f32.xlu0 %v177
      %v179 = vpop.xlane.xlu0 %178
      %v180 = vld [vmem:[#allocation4] sm:$0x3]
      %v181 = vsel %vm82, %v180, 0.0
      %182 = vadd.xlane.f32.xlu0 %v181
      %v183 = vpop.xlane.xlu0 %182
      %v184 = vld [vmem:[#allocation5] sm:$0x3]
      %v185 = vsel %vm82, %v184, 0.0
      %186 = vadd.xlane.f32.xlu0 %v185
      %v187 = vpop.xlane.xlu0 %186
      %vm188 = vcmask 7168
      %v189 = vsel %vm188, %v175, %v179
      %vm190 = vcmask 15360
      %v191 = vsel %vm190, %v189, %v183
      %vm192 = vcmask 23552
      %v193 = vsel %vm192, %v191, %v187
      %vm194 = vcmask 31744
      %v195 = vsel %vm194, %v193, 0.0
      %vm196 = vcmask 39936
      %v197 = vsel %vm196, %v195, 0.0
      %vm198 = vcmask 48128
      %v199 = vsel %vm198, %v197, 0.0
      %vm200 = vcmask 56320
      %v201 = vsel %vm200, %v199, 0.0
      %vm202 = vcmask 58368
      %203 = vst.msk [vmem:[#allocation11] sm:$0x3] %vm202, %v201
    $region25: #{tpu_custom_call.1} parent=1 // pred_fallthru
      _
    // Predicated region
    $region26: #{tpu_custom_call.1} parent=1 // pred_check
      _
    $region27: #{tpu_custom_call.1} parent=1 // pred_check_branch
      %205 = sbr.rel (0) target = $region29
    $region28: #{tpu_custom_call.1} parent=1 // pred_region
      %207 = vsyncadd [#allocation8], 0
      %s209 = sshll.u32 [#allocation11], 4
      %s210 = int_to_ptr.vmem [resolvable:$true] %s209
      %s211 = sshll.u32 %s2, 4
      %s212 = int_to_ptr.hbm [resolvable:$true] %s211
      %214 = dma.vmem_to_hbm [thread:$0]  %s210, 32, %s212, [#allocation8]
    $region29: #{tpu_custom_call.1} parent=1 // pred_fallthru
      _
    // Predicated region
    $region30: #{tpu_custom_call.1} parent=1 // pred_check
      _
    $region31: #{tpu_custom_call.1} parent=1 // pred_check_branch
      %216 = sbr.rel (0) target = $region33
    $region32: #{tpu_custom_call.1} parent=1 // pred_region
      %218 = dma.done [#allocation8], 32
    $region33: #{tpu_custom_call.1} parent=1 // pred_fallthru
      _
    %219 = vsyncpa [#allocation7], 1
    %220 = vsyncpa [#allocation10], 1
    %221 = vsyncpa [#allocation8], 1

</llo_original>
